<compile_context>
chip_gen: v6e
topology: v6e:2x2x1
jax: 0.10.0
libtpu: 0.0.40
codegen_flags: <defaults>
</compile_context>

<pallas_src>
import jax
import jax.numpy as jnp
from jax import lax
from jax.experimental import pallas as pl
from jax.experimental.pallas import tpu as pltpu


def _make_cost_kernel(num_points, num_queries, w_class, w_mask, w_dice):
    inv_p = 1.0 / float(num_points)
    nq = num_queries

    def cost_kernel(logits_ref, onehot_ref, outm_ref, tgtm_ref, tsum_ref,
                    valid_ref, out_ref):
        logits = logits_ref[0].astype(jnp.float32)   # (NQ, C)
        onehot = onehot_ref[0]                       # (NT_PAD, C) f32 (tiny)
        om_bf = outm_ref[0]                          # (NQ, P)     bf16
        tm_bf = tgtm_ref[0]                          # (NT_PAD, P) bf16
        t_sum = tsum_ref[0]                          # (1, NT_PAD) f32
        valid = valid_ref[0]                         # (1, NT_PAD) f32

        # --- softmax over classes -> classification cost via 'nc,mc->nm' ---
        m = jnp.max(logits, axis=-1, keepdims=True)
        e = jnp.exp(logits - m)
        prob = e * pl.reciprocal(jnp.sum(e, axis=-1, keepdims=True), approx=True)
        nm_dims = (((1,), (1,)), ((), ()))           # 'nc,mc->nm'
        cost_class = -lax.dot_general(prob, onehot, nm_dims,
                                      preferred_element_type=jnp.float32)

        # --- elementwise mask math in f32 (v5e has no bf16 VPU/EUP) ---
        om = om_bf.astype(jnp.float32)
        # batch_sigmoid_ce simplifies (softplus(-x) - softplus(x) == -x) to:
        #   cost_mask = ( dot(-om, tm^T) + rowsum(softplus(om)) ) / P
        sp_row = jnp.sum(jnp.maximum(om, 0.0) + jnp.log1p(jnp.exp(-jnp.abs(om))),
                         axis=-1, keepdims=True)                       # (NQ, 1)
        sig = pl.reciprocal(1.0 + jnp.exp(-om), approx=True)           # sigmoid
        s_sum = jnp.sum(sig, axis=-1, keepdims=True)                   # (NQ, 1)

        # --- one stacked bf16 MXU push for both mask-side contractions ---
        lhs = jnp.concatenate([-om_bf, sig.astype(jnp.bfloat16)], axis=0)  # (2NQ, P)
        M = lax.dot_general(lhs, tm_bf, nm_dims,
                            preferred_element_type=jnp.float32)           # (2NQ, NT_PAD)
        dot_neg = M[:nq]        # dot(-om, tm^T)
        dot_sig = M[nq:]        # dot(sigmoid(om), tm^T)

        cost_mask = (dot_neg + sp_row) * inv_p
        cost_dice = 1.0 - (2.0 * dot_sig + 1.0) * pl.reciprocal(
            s_sum + t_sum + 1.0, approx=True)

        # --- weighted total + invalid-instance masking ---
        C = w_mask * cost_mask + w_class * cost_class + w_dice * cost_dice
        C = jnp.where(valid > 0.5, C, 1.0e6)

        # pred_score = max prob excluding last (no-object) class, via iota mask
        ncls = prob.shape[-1]
        cls_idx = lax.broadcasted_iota(jnp.int32, prob.shape, 1)
        score = jnp.max(jnp.where(cls_idx < ncls - 1, prob, -jnp.inf),
                        axis=-1, keepdims=True)                        # (NQ, 1)

        # pack score into the last lane of the lane-dense output slab
        nt_pad = C.shape[-1]
        lane = lax.broadcasted_iota(jnp.int32, C.shape, 1)
        out_ref[0] = jnp.where(lane == nt_pad - 1, score, C)

    return cost_kernel


def _bilinear_weight_matrix(coords, H, W):
    """(P, H*W) bilinear sampling matrix matching grid_sample(align_corners=False,
    padding_mode='zeros'). coords: (P, 2) in [0,1], [:,0]=x (width), [:,1]=y."""
    x = coords[:, 0] * W - 0.5
    y = coords[:, 1] * H - 0.5
    x0 = jnp.floor(x); y0 = jnp.floor(y)
    x1 = x0 + 1.0;     y1 = y0 + 1.0
    wx1 = x - x0; wx0 = 1.0 - wx1
    wy1 = y - y0; wy0 = 1.0 - wy1
    HW = H * W

    def term(ix, iy, w):
        ok = ((ix >= 0) & (ix < W) & (iy >= 0) & (iy < H)).astype(jnp.float32)
        idx = (jnp.clip(iy, 0, H - 1) * W + jnp.clip(ix, 0, W - 1)).astype(jnp.int32)
        return jax.nn.one_hot(idx, HW, dtype=jnp.float32) * (w * ok)[:, None]

    return (term(x0, y0, wx0 * wy0) + term(x1, y0, wx1 * wy0)
            + term(x0, y1, wx0 * wy1) + term(x1, y1, wx1 * wy1))


def frame_matcher_costs(pred_logits, pred_masks, tgt_labels, tgt_masks,
                        valid_inst, key, *, num_points=128,
                        cost_class=1.0, cost_mask=1.0, cost_dice=1.0):
    """Returns (C, pred_score): cost matrices (B, NQ, NT) and per-query class
    score (B, NQ, 1), mirroring FrameMatcher.memory_efficient_forward up to the
    Hungarian assignment."""
    B, NQ, NC = pred_logits.shape
    NT = tgt_labels.shape[1]
    H, W = pred_masks.shape[-2:]
    # pad target axis to a multiple of 128 lanes, with one spare lane for score
    NT_PAD = ((NT + 1 + 127) // 128) * 128

    # --- glue: shared-per-batch random point coords + matmul-based bilinear sampling ---
    coords = jax.random.uniform(key, (B, num_points, 2), jnp.float32)
    wmat = jax.vmap(lambda c: _bilinear_weight_matrix(c, H, W))(coords)   # (B, P, HW)
    pred_flat = pred_masks.reshape(B, NQ, H * W).astype(jnp.float32)
    tgt_flat = tgt_masks.reshape(B, NT, H * W).astype(jnp.float32)
    out_sampled = jnp.einsum('bnf,bpf->bnp', pred_flat, wmat)             # (B, NQ, P) f32
    tgt_sampled = jnp.einsum('bmf,bpf->bmp', tgt_flat, wmat)              # (B, NT, P) f32

    # t_sum = targets.sum(-1) (data already wrapper-resident; tiny input)
    t_sum = jnp.sum(tgt_sampled, axis=-1)                                 # (B, NT)
    t_sum = jnp.pad(t_sum, ((0, 0), (0, NT_PAD - NT)))[:, None, :]        # (B, 1, NT_PAD)

    # bf16 for the heavy (B,*,P) inputs; pad target axis to NT_PAD lanes
    out_sampled = out_sampled.astype(jnp.bfloat16)
    tgt_sampled = jnp.pad(tgt_sampled.astype(jnp.bfloat16),
                          ((0, 0), (0, NT_PAD - NT), (0, 0)))             # (B, NT_PAD, P)

    # one-hot labels (NOTE: out-of-range/padded labels one-hot to zero; invalid
    # columns are handled by the 1e6 valid_inst masking)
    onehot = jax.nn.one_hot(tgt_labels, NC, dtype=jnp.float32)
    onehot = jnp.pad(onehot, ((0, 0), (0, NT_PAD - NT), (0, 0)))          # (B, NT_PAD, NC)
    valid = jnp.pad(valid_inst.astype(jnp.float32),
                    ((0, 0), (0, NT_PAD - NT)))[:, None, :]               # (B, 1, NT_PAD)

    kernel = _make_cost_kernel(num_points, NQ, cost_class, cost_mask, cost_dice)

    slab = pl.pallas_call(
        kernel,
        grid=(B,),
        in_specs=[
            pl.BlockSpec((1, NQ, NC), lambda b: (b, 0, 0)),               # logits (bf16)
            pl.BlockSpec((1, NT_PAD, NC), lambda b: (b, 0, 0)),           # one-hot labels
            pl.BlockSpec((1, NQ, num_points), lambda b: (b, 0, 0)),       # sampled out_mask
            pl.BlockSpec((1, NT_PAD, num_points), lambda b: (b, 0, 0)),   # sampled tgt_mask
            pl.BlockSpec((1, 1, NT_PAD), lambda b: (b, 0, 0)),            # t_sum
            pl.BlockSpec((1, 1, NT_PAD), lambda b: (b, 0, 0)),            # valid_inst
        ],
        out_specs=pl.BlockSpec((1, NQ, NT_PAD), lambda b: (b, 0, 0)),     # lane-dense slab
        out_shape=jax.ShapeDtypeStruct((B, NQ, NT_PAD), jnp.float32),
        compiler_params=pltpu.CompilerParams(
            dimension_semantics=("parallel",)),
    )(pred_logits.astype(jnp.bfloat16), onehot, out_sampled, tgt_sampled,
      t_sum, valid)

    C = slab[..., :NT]                        # (B, NQ, NT)
    pred_score = slab[..., NT_PAD - 1:NT_PAD]  # (B, NQ, 1)
    return C, pred_score


if __name__ == "__main__":
    key = jax.random.PRNGKey(0)
    B, NQ, NCLS, NT, H, W, P = 2, 16, 4, 4, 16, 16, 128
    k1, k2, k3, k4, k5 = jax.random.split(key, 5)

    pred_logits = jax.random.normal(k1, (B, NQ, NCLS + 1), jnp.float32)
    pred_masks = jax.random.normal(k2, (B, NQ, H, W), jnp.float32)
    tgt_labels = jax.random.randint(k3, (B, NT), 0, NCLS)
    tgt_masks = (jax.random.uniform(k4, (B, NT, H, W)) > 0.5).astype(jnp.float32)
    valid_inst = jnp.array([[True, True, True, False],
                            [True, False, True, True]])
    select_thr = 0.5

    C, pred_score = frame_matcher_costs(
        pred_logits, pred_masks, tgt_labels, tgt_masks, valid_inst, k5,
        num_points=P, cost_class=1.0, cost_mask=1.0, cost_dice=1.0)

    # glue matching the module's post-processing that has a JAX equivalent:
    aux_tgt_i = jnp.argmin(C, axis=-1)            # torch.argmin(C, dim=1)
    score_mask = pred_score[..., 0] > select_thr  # pred_score > select_thr
    # TODO(synk): linear_sum_assignment (Hungarian) is a sequential CPU algorithm
    # with no clean Pallas equivalent; the (src_i, tgt_i) indices derived from it
    # are not computed here.

    jax.block_until_ready((C, pred_score, aux_tgt_i, score_mask))
    print("KERNEL_OK")
</pallas_src>

<mosaic_0001>
module attributes {stable_mosaic.version = 11 : i64} {
  func.func @cost_kernel(%arg0: i32, %arg1: memref<1x16x5xbf16, #tpu.memory_space<vmem>>, %arg2: memref<1x128x5xf32, #tpu.memory_space<vmem>>, %arg3: memref<1x16x128xbf16, #tpu.memory_space<vmem>>, %arg4: memref<1x128x128xbf16, #tpu.memory_space<vmem>>, %arg5: memref<1x1x128xf32, #tpu.memory_space<vmem>>, %arg6: memref<1x1x128xf32, #tpu.memory_space<vmem>>, %arg7: memref<1x16x128xf32, #tpu.memory_space<vmem>>) attributes {dimension_semantics = [#tpu.dimension_semantics<parallel>], iteration_bounds = array<i64: 2>, scalar_prefetch = 0 : i64, scratch_operands = 0 : i64, tpu.core_type = #tpu.core_type<tc>, window_params = [{transform_indices = @transform_0, window_bounds = array<i64: 1, 16, 5>}, {transform_indices = @transform_1, window_bounds = array<i64: 1, 128, 5>}, {transform_indices = @transform_2, window_bounds = array<i64: 1, 16, 128>}, {transform_indices = @transform_3, window_bounds = array<i64: 1, 128, 128>}, {transform_indices = @transform_4, window_bounds = array<i64: 1, 1, 128>}, {transform_indices = @transform_5, window_bounds = array<i64: 1, 1, 128>}, {transform_indices = @transform_6, window_bounds = array<i64: 1, 16, 128>}]} {
    %c0 = arith.constant 0 : index
    %c0_0 = arith.constant 0 : index
    %c0_1 = arith.constant 0 : index
    %0 = vector.load %arg1[%c0, %c0_0, %c0_1] : memref<1x16x5xbf16, #tpu.memory_space<vmem>>, vector<1x16x5xbf16>
    %1 = vector.shape_cast %0 : vector<1x16x5xbf16> to vector<16x5xbf16>
    %2 = arith.extf %1 : vector<16x5xbf16> to vector<16x5xf32>
    %c0_2 = arith.constant 0 : index
    %c0_3 = arith.constant 0 : index
    %c0_4 = arith.constant 0 : index
    %3 = vector.load %arg2[%c0_2, %c0_3, %c0_4] : memref<1x128x5xf32, #tpu.memory_space<vmem>>, vector<1x128x5xf32>
    %4 = vector.shape_cast %3 : vector<1x128x5xf32> to vector<128x5xf32>
    %c0_5 = arith.constant 0 : index
    %c0_6 = arith.constant 0 : index
    %c0_7 = arith.constant 0 : index
    %5 = vector.load %arg3[%c0_5, %c0_6, %c0_7] : memref<1x16x128xbf16, #tpu.memory_space<vmem>>, vector<1x16x128xbf16>
    %6 = vector.shape_cast %5 : vector<1x16x128xbf16> to vector<16x128xbf16>
    %c0_8 = arith.constant 0 : index
    %c0_9 = arith.constant 0 : index
    %c0_10 = arith.constant 0 : index
    %7 = vector.load %arg4[%c0_8, %c0_9, %c0_10] : memref<1x128x128xbf16, #tpu.memory_space<vmem>>, vector<1x128x128xbf16>
    %8 = vector.shape_cast %7 : vector<1x128x128xbf16> to vector<128x128xbf16>
    %c0_11 = arith.constant 0 : index
    %c0_12 = arith.constant 0 : index
    %c0_13 = arith.constant 0 : index
    %9 = vector.load %arg5[%c0_11, %c0_12, %c0_13] : memref<1x1x128xf32, #tpu.memory_space<vmem>>, vector<1x1x128xf32>
    %10 = vector.shape_cast %9 : vector<1x1x128xf32> to vector<1x128xf32>
    %c0_14 = arith.constant 0 : index
    %c0_15 = arith.constant 0 : index
    %c0_16 = arith.constant 0 : index
    %11 = vector.load %arg6[%c0_14, %c0_15, %c0_16] : memref<1x1x128xf32, #tpu.memory_space<vmem>>, vector<1x1x128xf32>
    %12 = vector.shape_cast %11 : vector<1x1x128xf32> to vector<1x128xf32>
    %cst = arith.constant dense<0xFF800000> : vector<16xf32>
    %13 = vector.multi_reduction <maximumf>, %2, %cst [1] : vector<16x5xf32> to vector<16xf32>
    %14 = vector.shape_cast %13 : vector<16xf32> to vector<16x1xf32>
    %15 = vector.broadcast %14 : vector<16x1xf32> to vector<16x5xf32>
    %16 = arith.subf %2, %15 : vector<16x5xf32>
    %17 = math.exp %16 : vector<16x5xf32>
    %cst_17 = arith.constant dense<0.000000e+00> : vector<16xf32>
    %18 = vector.multi_reduction <add>, %17, %cst_17 [1] : vector<16x5xf32> to vector<16xf32>
    %19 = vector.shape_cast %18 : vector<16xf32> to vector<16x1xf32>
    %20 = tpu.reciprocal %19 {approx = true} : vector<16x1xf32> -> vector<16x1xf32>
    %21 = vector.broadcast %20 : vector<16x1xf32> to vector<16x5xf32>
    %22 = arith.mulf %17, %21 : vector<16x5xf32>
    %cst_18 = arith.constant dense<0.000000e+00> : vector<16x128xf32>
    %23 = tpu.matmul %22, %4, %cst_18 {dimension_numbers = #tpu.dot_dimension_numbers<[1], [1], [0], [0], [0, 0, 1, 0], [], []>} : vector<16x5xf32>, vector<128x5xf32>, vector<16x128xf32> -> vector<16x128xf32>
    %cst_19 = arith.constant 0.000000e+00 : f32
    %24 = vector.broadcast %cst_19 : f32 to vector<16x128xf32>
    %25 = arith.subf %24, %23 : vector<16x128xf32>
    %26 = arith.extf %6 : vector<16x128xbf16> to vector<16x128xf32>
    %cst_20 = arith.constant 0.000000e+00 : f32
    %27 = vector.broadcast %cst_20 : f32 to vector<16x128xf32>
    %28 = arith.maximumf %26, %27 : vector<16x128xf32>
    %29 = math.absf %26 : vector<16x128xf32>
    %cst_21 = arith.constant 0.000000e+00 : f32
    %30 = vector.broadcast %cst_21 : f32 to vector<16x128xf32>
    %31 = arith.subf %30, %29 : vector<16x128xf32>
    %32 = math.exp %31 : vector<16x128xf32>
    %33 = math.log1p %32 : vector<16x128xf32>
    %34 = arith.addf %28, %33 : vector<16x128xf32>
    %cst_22 = arith.constant dense<0.000000e+00> : vector<16xf32>
    %35 = vector.multi_reduction <add>, %34, %cst_22 [1] : vector<16x128xf32> to vector<16xf32>
    %36 = vector.shape_cast %35 : vector<16xf32> to vector<16x1xf32>
    %cst_23 = arith.constant 0.000000e+00 : f32
    %37 = vector.broadcast %cst_23 : f32 to vector<16x128xf32>
    %38 = arith.subf %37, %26 : vector<16x128xf32>
    %39 = math.exp %38 : vector<16x128xf32>
    %cst_24 = arith.constant 1.000000e+00 : f32
    %40 = vector.broadcast %cst_24 : f32 to vector<16x128xf32>
    %41 = arith.addf %40, %39 : vector<16x128xf32>
    %42 = tpu.reciprocal %41 {approx = true} : vector<16x128xf32> -> vector<16x128xf32>
    %cst_25 = arith.constant dense<0.000000e+00> : vector<16xf32>
    %43 = vector.multi_reduction <add>, %42, %cst_25 [1] : vector<16x128xf32> to vector<16xf32>
    %44 = vector.shape_cast %43 : vector<16xf32> to vector<16x1xf32>
    %cst_26 = arith.constant 0.000000e+00 : bf16
    %45 = vector.broadcast %cst_26 : bf16 to vector<16x128xbf16>
    %46 = arith.subf %45, %6 : vector<16x128xbf16>
    %47 = arith.truncf %42 : vector<16x128xf32> to vector<16x128xbf16>
    %48 = tpu.concatenate %46, %47 in 0 : vector<16x128xbf16>, vector<16x128xbf16> -> vector<32x128xbf16>
    %cst_27 = arith.constant dense<0.000000e+00> : vector<32x128xf32>
    %49 = tpu.matmul %48, %8, %cst_27 {dimension_numbers = #tpu.dot_dimension_numbers<[1], [1], [0], [0], [0, 0, 1, 0], [], []>} : vector<32x128xbf16>, vector<128x128xbf16>, vector<32x128xf32> -> vector<32x128xf32>
    %50 = vector.extract_strided_slice %49 {offsets = [0, 0], sizes = [16, 128], strides = [1, 1]} : vector<32x128xf32> to vector<16x128xf32>
    %51 = vector.extract_strided_slice %49 {offsets = [16, 0], sizes = [16, 128], strides = [1, 1]} : vector<32x128xf32> to vector<16x128xf32>
    %52 = vector.broadcast %36 : vector<16x1xf32> to vector<16x128xf32>
    %53 = arith.addf %50, %52 : vector<16x128xf32>
    %cst_28 = arith.constant 7.812500e-03 : f32
    %54 = vector.broadcast %cst_28 : f32 to vector<16x128xf32>
    %55 = arith.mulf %53, %54 : vector<16x128xf32>
    %cst_29 = arith.constant 2.000000e+00 : f32
    %56 = vector.broadcast %cst_29 : f32 to vector<16x128xf32>
    %57 = arith.mulf %56, %51 : vector<16x128xf32>
    %cst_30 = arith.constant 1.000000e+00 : f32
    %58 = vector.broadcast %cst_30 : f32 to vector<16x128xf32>
    %59 = arith.addf %57, %58 : vector<16x128xf32>
    %60 = vector.broadcast %44 : vector<16x1xf32> to vector<16x128xf32>
    %61 = vector.broadcast %10 : vector<1x128xf32> to vector<16x128xf32>
    %62 = arith.addf %60, %61 : vector<16x128xf32>
    %cst_31 = arith.constant 1.000000e+00 : f32
    %63 = vector.broadcast %cst_31 : f32 to vector<16x128xf32>
    %64 = arith.addf %62, %63 : vector<16x128xf32>
    %65 = tpu.reciprocal %64 {approx = true} : vector<16x128xf32> -> vector<16x128xf32>
    %66 = arith.mulf %59, %65 : vector<16x128xf32>
    %cst_32 = arith.constant 1.000000e+00 : f32
    %67 = vector.broadcast %cst_32 : f32 to vector<16x128xf32>
    %68 = arith.subf %67, %66 : vector<16x128xf32>
    %cst_33 = arith.constant 1.000000e+00 : f32
    %69 = vector.broadcast %cst_33 : f32 to vector<16x128xf32>
    %70 = arith.mulf %69, %55 : vector<16x128xf32>
    %cst_34 = arith.constant 1.000000e+00 : f32
    %71 = vector.broadcast %cst_34 : f32 to vector<16x128xf32>
    %72 = arith.mulf %71, %25 : vector<16x128xf32>
    %73 = arith.addf %70, %72 : vector<16x128xf32>
    %cst_35 = arith.constant 1.000000e+00 : f32
    %74 = vector.broadcast %cst_35 : f32 to vector<16x128xf32>
    %75 = arith.mulf %74, %68 : vector<16x128xf32>
    %76 = arith.addf %73, %75 : vector<16x128xf32>
    %cst_36 = arith.constant 5.000000e-01 : f32
    %77 = vector.broadcast %cst_36 : f32 to vector<1x128xf32>
    %78 = arith.cmpf ogt, %12, %77 : vector<1x128xf32>
    %cst_37 = arith.constant 1.000000e+06 : f32
    %79 = vector.shape_cast %78 : vector<1x128xi1> to vector<1x128xi1>
    %80 = vector.broadcast %79 : vector<1x128xi1> to vector<16x128xi1>
    %81 = vector.broadcast %cst_37 : f32 to vector<16x128xf32>
    %82 = arith.select %80, %76, %81 : vector<16x128xi1>, vector<16x128xf32>
    %83 = tpu.iota {dimensions = array<i32: 1>} : vector<16x5xi32>
    %c4_i32 = arith.constant 4 : i32
    %84 = vector.broadcast %c4_i32 : i32 to vector<16x5xi32>
    %85 = arith.cmpi slt, %83, %84 : vector<16x5xi32>
    %cst_38 = arith.constant 0xFF800000 : f32
    %86 = vector.broadcast %cst_38 : f32 to vector<16x5xf32>
    %87 = arith.select %85, %22, %86 : vector<16x5xi1>, vector<16x5xf32>
    %cst_39 = arith.constant dense<0xFF800000> : vector<16xf32>
    %88 = vector.multi_reduction <maximumf>, %87, %cst_39 [1] : vector<16x5xf32> to vector<16xf32>
    %89 = vector.shape_cast %88 : vector<16xf32> to vector<16x1xf32>
    %90 = tpu.iota {dimensions = array<i32: 1>} : vector<16x128xi32>
    %c127_i32 = arith.constant 127 : i32
    %91 = vector.broadcast %c127_i32 : i32 to vector<16x128xi32>
    %92 = arith.cmpi eq, %90, %91 : vector<16x128xi32>
    %93 = vector.shape_cast %89 : vector<16x1xf32> to vector<16x1xf32>
    %94 = vector.broadcast %93 : vector<16x1xf32> to vector<16x128xf32>
    %95 = arith.select %92, %94, %82 : vector<16x128xi1>, vector<16x128xf32>
    %c0_40 = arith.constant 0 : index
    %c0_41 = arith.constant 0 : index
    %c0_42 = arith.constant 0 : index
    %96 = vector.load %arg7[%c0_40, %c0_41, %c0_42] : memref<1x16x128xf32, #tpu.memory_space<vmem>>, vector<1x16x128xf32>
    %97 = vector.shape_cast %96 : vector<1x16x128xf32> to vector<16x128xf32>
    %98 = vector.shape_cast %95 : vector<16x128xf32> to vector<1x16x128xf32>
    tpu.vector_store %arg7[%c0_40, %c0_41, %c0_42], %98 {strides = array<i32>} : memref<1x16x128xf32, #tpu.memory_space<vmem>>, vector<1x16x128xf32>,
    return
  }
  func.func @transform_0(%arg0: i32) -> (i32, i32, i32) {
    %c0_i32 = arith.constant 0 : i32
    %c0_i32_0 = arith.constant 0 : i32
    %c0_i32_1 = arith.constant 0 : i32
    return %arg0, %c0_i32, %c0_i32_0 : i32, i32, i32
  }
  func.func @transform_1(%arg0: i32) -> (i32, i32, i32) {
    %c0_i32 = arith.constant 0 : i32
    %c0_i32_0 = arith.constant 0 : i32
    %c0_i32_1 = arith.constant 0 : i32
    return %arg0, %c0_i32, %c0_i32_0 : i32, i32, i32
  }
  func.func @transform_2(%arg0: i32) -> (i32, i32, i32) {
    %c0_i32 = arith.constant 0 : i32
    %c0_i32_0 = arith.constant 0 : i32
    %c0_i32_1 = arith.constant 0 : i32
    return %arg0, %c0_i32, %c0_i32_0 : i32, i32, i32
  }
  func.func @transform_3(%arg0: i32) -> (i32, i32, i32) {
    %c0_i32 = arith.constant 0 : i32
    %c0_i32_0 = arith.constant 0 : i32
    %c0_i32_1 = arith.constant 0 : i32
    return %arg0, %c0_i32, %c0_i32_0 : i32, i32, i32
  }
  func.func @transform_4(%arg0: i32) -> (i32, i32, i32) {
    %c0_i32 = arith.constant 0 : i32
    %c0_i32_0 = arith.constant 0 : i32
    %c0_i32_1 = arith.constant 0 : i32
    return %arg0, %c0_i32, %c0_i32_0 : i32, i32, i32
  }
  func.func @transform_5(%arg0: i32) -> (i32, i32, i32) {
    %c0_i32 = arith.constant 0 : i32
    %c0_i32_0 = arith.constant 0 : i32
    %c0_i32_1 = arith.constant 0 : i32
    return %arg0, %c0_i32, %c0_i32_0 : i32, i32, i32
  }
  func.func @transform_6(%arg0: i32) -> (i32, i32, i32) {
    %c0_i32 = arith.constant 0 : i32
    %c0_i32_0 = arith.constant 0 : i32
    %c0_i32_1 = arith.constant 0 : i32
    return %arg0, %c0_i32, %c0_i32_0 : i32, i32, i32
  }
}

</mosaic_0001>

<llo_original>
// kernel: tpu_custom_call.1
$region0: #{tpu_custom_call.1}
  #allocation0 [shape = 'u32[]', space=smem, size = 0x4, offset = 0x4, fixed_abs, tag = 'smem constant byte address 0x4 - core index']
  #allocation1 [shape = 'u32[144,128]{1,0:T(1,128)}', space=vmem, size = 0x12000, scoped, tag = 'internal scratch']
  %s0 = inlined_call_operand.vmem [shape: bf16[2,16,5], index: 0, kind: input, shape index: {}]
  %s1 = inlined_call_operand.vmem [shape: f32[2,128,5], index: 1, kind: input, shape index: {}]
  %s2 = inlined_call_operand.vmem [shape: bf16[2,16,128], index: 2, kind: input, shape index: {}]
  %s3 = inlined_call_operand.vmem [shape: bf16[2,128,128], index: 3, kind: input, shape index: {}]
  %s4 = inlined_call_operand.vmem [shape: f32[2,1,128], index: 4, kind: input, shape index: {}]
  %s5 = inlined_call_operand.vmem [shape: f32[2,1,128], index: 5, kind: input, shape index: {}]
  %s6 = inlined_call_operand.hbm [shape: f32[2,16,128], index: 6, kind: output, shape index: {}]
  %s7 = sld [smem:[#allocation0]]
  $region57: #{tpu_custom_call.1} parent=0
    _
  %s9 = ssub.s32 1, %s7
  %s10 = scalar_select 0, %s9, %s7
  $region1: #{tpu_custom_call.1} parent=0
    #allocation2 [shape = 'u8[16384]{0}', space=vmem, size = 0x4000, scoped, tag = 'output window, operand 0']
    #allocation3 [shape = 's32[2]{0}', space=sflag, size = 0x8, scoped, tag = 'scoped memory for tpu_custom_call.1']
    %11 = vsyncpa [#allocation3], 0
    %s12 = scalar_lea.sflag [#allocation3], 1
    %13 = vsyncpa %s12, 0
    loop: start=0, step=1, limit=4
    $region2: #{tpu_custom_call.1} parent=1 // loop_pre_header
      _
    $region3: #{tpu_custom_call.1} parent=1 // loop_header
      %s15 = sphi 0, %s19
      %p16 = scmp.ge.s32.totalorder %s15, 4
      %s25 = sphi 0, %s27
      %s28 = sphi 0, %s25
      %s29 = sphi 0, %s28
      %s45 = sphi 0, %s29
      %s51 = sphi 0, %s53
      %s54 = sphi 0, %s51
      %s55 = sphi 0, %s54
      %s71 = sphi 0, %s55
      %s77 = sphi 0, %s79
      %s80 = sphi 0, %s77
      %s81 = sphi 0, %s80
      %s97 = sphi 0, %s81
      %s103 = sphi 0, %s105
      %s106 = sphi 0, %s103
      %s107 = sphi 0, %s106
      %s123 = sphi 0, %s107
      %s129 = sphi 0, %s131
      %s132 = sphi 0, %s129
      %s133 = sphi 0, %s132
      %s149 = sphi 0, %s133
      %s155 = sphi 0, %s157
      %s158 = sphi 0, %s155
      %s159 = sphi 0, %s158
      %s175 = sphi 0, %s159
      %s181 = sphi 0, %s183
      %s184 = sphi 0, %s181
      %s185 = sphi 0, %s184
      %s201 = sphi 0, %s185
    $region4: #{tpu_custom_call.1} parent=1 // loop_header_branch
      %18 = sbr.rel (%p16) target = $region8
    $region5: #{tpu_custom_call.1} parent=1 // loop_body
      %s20 = ssub.s32 %s15, 1
      %s21 = ssub.s32 %s15, 2
      %s22 = sadd.s32 %s15, 1
      %s23 = ssub.s32 %s15, %s22
      %p24 = scmp.eq.s32.totalorder %s23, 0
      %s26 = sadd.s32 %s25, 1
      %s27 = scalar_select %p24, %s25, %s26
      %p30 = pneg %p24
      %p31 = scmp.eq.s32.totalorder %s15, 1
      %p32 = por %p30, %p31
      %p33 = scmp.ne.s32.totalorder %s25, %s28
      %p34 = scmp.eq.s32.totalorder %s15, 0
      %p35 = por %p33, %p34
      %p36 = scmp.ne.s32.totalorder %s25, %s28
      %p37 = scmp.eq.s32.totalorder %s20, 1
      %p38 = por %p36, %p37
      %p39 = scmp.ne.s32.totalorder %s28, %s29
      %p40 = scmp.eq.s32.totalorder %s20, 0
      %p41 = por %p39, %p40
      %p42 = scmp.ne.s32.totalorder %s28, %s29
      %p43 = scmp.eq.s32.totalorder %s21, 1
      %p44 = por %p42, %p43
      %p46 = scmp.ne.s32.totalorder %s29, %s45
      %p47 = scmp.eq.s32.totalorder %s21, 0
      %p48 = por %p46, %p47
      %s49 = ssub.s32 %s15, %s22
      %p50 = scmp.eq.s32.totalorder %s49, 0
      %s52 = sadd.s32 %s51, 1
      %s53 = scalar_select %p50, %s51, %s52
      %p56 = pneg %p50
      %p57 = scmp.eq.s32.totalorder %s15, 1
      %p58 = por %p56, %p57
      %p59 = scmp.ne.s32.totalorder %s51, %s54
      %p60 = scmp.eq.s32.totalorder %s15, 0
      %p61 = por %p59, %p60
      %p62 = scmp.ne.s32.totalorder %s51, %s54
      %p63 = scmp.eq.s32.totalorder %s20, 1
      %p64 = por %p62, %p63
      %p65 = scmp.ne.s32.totalorder %s54, %s55
      %p66 = scmp.eq.s32.totalorder %s20, 0
      %p67 = por %p65, %p66
      %p68 = scmp.ne.s32.totalorder %s54, %s55
      %p69 = scmp.eq.s32.totalorder %s21, 1
      %p70 = por %p68, %p69
      %p72 = scmp.ne.s32.totalorder %s55, %s71
      %p73 = scmp.eq.s32.totalorder %s21, 0
      %p74 = por %p72, %p73
      %s75 = ssub.s32 %s15, %s22
      %p76 = scmp.eq.s32.totalorder %s75, 0
      %s78 = sadd.s32 %s77, 1
      %s79 = scalar_select %p76, %s77, %s78
      %p82 = pneg %p76
      %p83 = scmp.eq.s32.totalorder %s15, 1
      %p84 = por %p82, %p83
      %p85 = scmp.ne.s32.totalorder %s77, %s80
      %p86 = scmp.eq.s32.totalorder %s15, 0
      %p87 = por %p85, %p86
      %p88 = scmp.ne.s32.totalorder %s77, %s80
      %p89 = scmp.eq.s32.totalorder %s20, 1
      %p90 = por %p88, %p89
      %p91 = scmp.ne.s32.totalorder %s80, %s81
      %p92 = scmp.eq.s32.totalorder %s20, 0
      %p93 = por %p91, %p92
      %p94 = scmp.ne.s32.totalorder %s80, %s81
      %p95 = scmp.eq.s32.totalorder %s21, 1
      %p96 = por %p94, %p95
      %p98 = scmp.ne.s32.totalorder %s81, %s97
      %p99 = scmp.eq.s32.totalorder %s21, 0
      %p100 = por %p98, %p99
      %s101 = ssub.s32 %s15, %s22
      %p102 = scmp.eq.s32.totalorder %s101, 0
      %s104 = sadd.s32 %s103, 1
      %s105 = scalar_select %p102, %s103, %s104
      %p108 = pneg %p102
      %p109 = scmp.eq.s32.totalorder %s15, 1
      %p110 = por %p108, %p109
      %p111 = scmp.ne.s32.totalorder %s103, %s106
      %p112 = scmp.eq.s32.totalorder %s15, 0
      %p113 = por %p111, %p112
      %p114 = scmp.ne.s32.totalorder %s103, %s106
      %p115 = scmp.eq.s32.totalorder %s20, 1
      %p116 = por %p114, %p115
      %p117 = scmp.ne.s32.totalorder %s106, %s107
      %p118 = scmp.eq.s32.totalorder %s20, 0
      %p119 = por %p117, %p118
      %p120 = scmp.ne.s32.totalorder %s106, %s107
      %p121 = scmp.eq.s32.totalorder %s21, 1
      %p122 = por %p120, %p121
      %p124 = scmp.ne.s32.totalorder %s107, %s123
      %p125 = scmp.eq.s32.totalorder %s21, 0
      %p126 = por %p124, %p125
      %s127 = ssub.s32 %s15, %s22
      %p128 = scmp.eq.s32.totalorder %s127, 0
      %s130 = sadd.s32 %s129, 1
      %s131 = scalar_select %p128, %s129, %s130
      %p134 = pneg %p128
      %p135 = scmp.eq.s32.totalorder %s15, 1
      %p136 = por %p134, %p135
      %p137 = scmp.ne.s32.totalorder %s129, %s132
      %p138 = scmp.eq.s32.totalorder %s15, 0
      %p139 = por %p137, %p138
      %p140 = scmp.ne.s32.totalorder %s129, %s132
      %p141 = scmp.eq.s32.totalorder %s20, 1
      %p142 = por %p140, %p141
      %p143 = scmp.ne.s32.totalorder %s132, %s133
      %p144 = scmp.eq.s32.totalorder %s20, 0
      %p145 = por %p143, %p144
      %p146 = scmp.ne.s32.totalorder %s132, %s133
      %p147 = scmp.eq.s32.totalorder %s21, 1
      %p148 = por %p146, %p147
      %p150 = scmp.ne.s32.totalorder %s133, %s149
      %p151 = scmp.eq.s32.totalorder %s21, 0
      %p152 = por %p150, %p151
      %s153 = ssub.s32 %s15, %s22
      %p154 = scmp.eq.s32.totalorder %s153, 0
      %s156 = sadd.s32 %s155, 1
      %s157 = scalar_select %p154, %s155, %s156
      %p160 = pneg %p154
      %p161 = scmp.eq.s32.totalorder %s15, 1
      %p162 = por %p160, %p161
      %p163 = scmp.ne.s32.totalorder %s155, %s158
      %p164 = scmp.eq.s32.totalorder %s15, 0
      %p165 = por %p163, %p164
      %p166 = scmp.ne.s32.totalorder %s155, %s158
      %p167 = scmp.eq.s32.totalorder %s20, 1
      %p168 = por %p166, %p167
      %p169 = scmp.ne.s32.totalorder %s158, %s159
      %p170 = scmp.eq.s32.totalorder %s20, 0
      %p171 = por %p169, %p170
      %p172 = scmp.ne.s32.totalorder %s158, %s159
      %p173 = scmp.eq.s32.totalorder %s21, 1
      %p174 = por %p172, %p173
      %p176 = scmp.ne.s32.totalorder %s159, %s175
      %p177 = scmp.eq.s32.totalorder %s21, 0
      %p178 = por %p176, %p177
      %s179 = ssub.s32 %s15, %s22
      %p180 = scmp.eq.s32.totalorder %s179, 0
      %s182 = sadd.s32 %s181, 1
      %s183 = scalar_select %p180, %s181, %s182
      %p186 = pneg %p180
      %p187 = scmp.eq.s32.totalorder %s15, 1
      %p188 = por %p186, %p187
      %p189 = scmp.ne.s32.totalorder %s181, %s184
      %p190 = scmp.eq.s32.totalorder %s15, 0
      %p191 = por %p189, %p190
      %p192 = scmp.ne.s32.totalorder %s181, %s184
      %p193 = scmp.eq.s32.totalorder %s20, 1
      %p194 = por %p192, %p193
      %p195 = scmp.ne.s32.totalorder %s184, %s185
      %p196 = scmp.eq.s32.totalorder %s20, 0
      %p197 = por %p195, %p196
      %p198 = scmp.ne.s32.totalorder %s184, %s185
      %p199 = scmp.eq.s32.totalorder %s21, 1
      %p200 = por %p198, %p199
      %p202 = scmp.ne.s32.totalorder %s185, %s201
      %p203 = scmp.eq.s32.totalorder %s21, 0
      %p204 = por %p202, %p203
      %p205 = scmp.le.s32.totalorder 1, %s15
      %p206 = scmp.lt.s32.totalorder %s15, 3
      %p207 = pnand %p205, %p206
      %p208 = pneg %p207
      // Predicated region
      $region9: #{tpu_custom_call.1} parent=5 // pred_check
        _
      $region10: #{tpu_custom_call.1} parent=5 // pred_check_branch
        %210 = sbr.rel (%p207) target = $region12
      $region11: #{tpu_custom_call.1} parent=5 // pred_region
        %s211 = ssub.s32 %s15, 1
      $region12: #{tpu_custom_call.1} parent=5 // pred_fallthru
        _
      %p212 = scmp.lt.s32.totalorder %s15, 2
      // Predicated region
      $region13: #{tpu_custom_call.1} parent=5 // pred_check
        %p213 = pneg %p212
      $region14: #{tpu_custom_call.1} parent=5 // pred_check_branch
        %215 = sbr.rel (%p213) target = $region16
      $region15: #{tpu_custom_call.1} parent=5 // pred_region
        // Predicated region
        $region17: #{tpu_custom_call.1} parent=15 // pred_check
          %p216 = pneg %p35
        $region18: #{tpu_custom_call.1} parent=15 // pred_check_branch
          %218 = sbr.rel (%p216) target = $region20
        $region19: #{tpu_custom_call.1} parent=15 // pred_region
          %p219 = scmp.lt.s32.totalorder %s15, 1
          %s220 = scalar_select %p219, %s15, 1
          %s221 = smul.addr %s220, 2
          %s222 = smul.addr %s221, 4
          %s223 = scalar_lea.vmem %s0, %s222
        $region20: #{tpu_custom_call.1} parent=15 // pred_fallthru
          _
        // Predicated region
        $region21: #{tpu_custom_call.1} parent=15 // pred_check
          %p224 = pneg %p61
        $region22: #{tpu_custom_call.1} parent=15 // pred_check_branch
          %226 = sbr.rel (%p224) target = $region24
        $region23: #{tpu_custom_call.1} parent=15 // pred_region
          %p227 = scmp.lt.s32.totalorder %s15, 1
          %s228 = scalar_select %p227, %s15, 1
          %s229 = smul.addr %s228, 16
          %s230 = smul.addr %s229, 8
          %s231 = scalar_lea.vmem %s1, %s230
        $region24: #{tpu_custom_call.1} parent=15 // pred_fallthru
          _
        // Predicated region
        $region25: #{tpu_custom_call.1} parent=15 // pred_check
          %p232 = pneg %p87
        $region26: #{tpu_custom_call.1} parent=15 // pred_check_branch
          %234 = sbr.rel (%p232) target = $region28
        $region27: #{tpu_custom_call.1} parent=15 // pred_region
          %p235 = scmp.lt.s32.totalorder %s15, 1
          %s236 = scalar_select %p235, %s15, 1
          %s237 = smul.addr %s236, 2
          %s238 = smul.addr %s237, 4
          %s239 = scalar_lea.vmem %s2, %s238
        $region28: #{tpu_custom_call.1} parent=15 // pred_fallthru
          _
        // Predicated region
        $region29: #{tpu_custom_call.1} parent=15 // pred_check
          %p240 = pneg %p113
        $region30: #{tpu_custom_call.1} parent=15 // pred_check_branch
          %242 = sbr.rel (%p240) target = $region32
        $region31: #{tpu_custom_call.1} parent=15 // pred_region
          %p243 = scmp.lt.s32.totalorder %s15, 1
          %s244 = scalar_select %p243, %s15, 1
          %s245 = smul.addr %s244, 16
          %s246 = smul.addr %s245, 4
          %s247 = scalar_lea.vmem %s3, %s246
        $region32: #{tpu_custom_call.1} parent=15 // pred_fallthru
          _
        // Predicated region
        $region33: #{tpu_custom_call.1} parent=15 // pred_check
          %p248 = pneg %p139
        $region34: #{tpu_custom_call.1} parent=15 // pred_check_branch
          %250 = sbr.rel (%p248) target = $region36
        $region35: #{tpu_custom_call.1} parent=15 // pred_region
          %p251 = scmp.lt.s32.totalorder %s15, 1
          %s252 = scalar_select %p251, %s15, 1
          %s253 = scalar_lea.vmem %s4, %s252
        $region36: #{tpu_custom_call.1} parent=15 // pred_fallthru
          _
        // Predicated region
        $region37: #{tpu_custom_call.1} parent=15 // pred_check
          %p254 = pneg %p165
        $region38: #{tpu_custom_call.1} parent=15 // pred_check_branch
          %256 = sbr.rel (%p254) target = $region40
        $region39: #{tpu_custom_call.1} parent=15 // pred_region
          %p257 = scmp.lt.s32.totalorder %s15, 1
          %s258 = scalar_select %p257, %s15, 1
          %s259 = scalar_lea.vmem %s5, %s258
        $region40: #{tpu_custom_call.1} parent=15 // pred_fallthru
          _
      $region16: #{tpu_custom_call.1} parent=5 // pred_fallthru
        _
      %p260 = scmp.le.s32.totalorder 1, %s15
      %p261 = scmp.lt.s32.totalorder %s15, 3
      %p262 = pnand %p260, %p261
      %p263 = pneg %p262
      // Predicated region
      $region41: #{tpu_custom_call.1} parent=5 // pred_check
        _
      $region42: #{tpu_custom_call.1} parent=5 // pred_check_branch
        %265 = sbr.rel (%p262) target = $region44
      $region43: #{tpu_custom_call.1} parent=5 // pred_region
        %s266 = ssub.s32 %s15, 1
        %p267 = scmp.lt.s32.totalorder %s20, 1
        %s268 = scalar_select %p267, %s20, 1
        %s269 = smul.addr %s268, 2
        %s270 = smul.addr %s269, 4
        %s271 = scalar_lea.vmem %s0, %s270
        %p272 = pneg %p41
        %p273 = pneg %p38
        %p274 = scmp.lt.s32.totalorder %s20, 1
        %s275 = scalar_select %p274, %s20, 1
        %s276 = smul.addr %s275, 16
        %s277 = smul.addr %s276, 8
        %s278 = scalar_lea.vmem %s1, %s277
        %p279 = pneg %p67
        %p280 = pneg %p64
        %p281 = scmp.lt.s32.totalorder %s20, 1
        %s282 = scalar_select %p281, %s20, 1
        %s283 = smul.addr %s282, 2
        %s284 = smul.addr %s283, 4
        %s285 = scalar_lea.vmem %s2, %s284
        %p286 = pneg %p93
        %p287 = pneg %p90
        %p288 = scmp.lt.s32.totalorder %s20, 1
        %s289 = scalar_select %p288, %s20, 1
        %s290 = smul.addr %s289, 16
        %s291 = smul.addr %s290, 4
        %s292 = scalar_lea.vmem %s3, %s291
        %p293 = pneg %p119
        %p294 = pneg %p116
        %p295 = scmp.lt.s32.totalorder %s20, 1
        %s296 = scalar_select %p295, %s20, 1
        %s297 = scalar_lea.vmem %s4, %s296
        %p298 = pneg %p145
        %p299 = pneg %p142
        %p300 = scmp.lt.s32.totalorder %s20, 1
        %s301 = scalar_select %p300, %s20, 1
        %s302 = scalar_lea.vmem %s5, %s301
        %p303 = pneg %p171
        %p304 = pneg %p168
        %p305 = pneg %p197
        %p306 = pneg %p194
        %s307 = sand.u32 %s184, 1
        %s308 = scalar_lea.sflag [#allocation3], %s307
        %s309 = sand.u32 %s184, 1
        %s310 = smul.addr %s309, 16
        %s311 = scalar_lea.vmem [#allocation2], %s310
        %p312 = scmp.lt.s32.totalorder %s20, 1
        %s313 = scalar_select %p312, %s20, 1
        %s314 = smul.addr %s313, 2
        %s315 = smul.addr %s314, 4
        %s316 = scalar_lea.vmem %s0, %s315
        %p317 = scmp.lt.s32.totalorder %s20, 1
        %s318 = scalar_select %p317, %s20, 1
        %s319 = smul.addr %s318, 16
        %s320 = smul.addr %s319, 8
        %s321 = scalar_lea.vmem %s1, %s320
        %p322 = scmp.lt.s32.totalorder %s20, 1
        %s323 = scalar_select %p322, %s20, 1
        %s324 = smul.addr %s323, 2
        %s325 = smul.addr %s324, 4
        %s326 = scalar_lea.vmem %s2, %s325
        %p327 = scmp.lt.s32.totalorder %s20, 1
        %s328 = scalar_select %p327, %s20, 1
        %s329 = smul.addr %s328, 16
        %s330 = smul.addr %s329, 4
        %s331 = scalar_lea.vmem %s3, %s330
        %p332 = scmp.lt.s32.totalorder %s20, 1
        %s333 = scalar_select %p332, %s20, 1
        %s334 = scalar_lea.vmem %s4, %s333
        %p335 = scmp.lt.s32.totalorder %s20, 1
        %s336 = scalar_select %p335, %s20, 1
        %s337 = scalar_lea.vmem %s5, %s336
        %v339 = vld [vmem:[%s316] sm:$0xf]
        %v340 = vld [vmem:[%s316 + $0x4] sm:$0xf]
        %v341 = vunpack.c.l.bf16 %v339
        %v342 = vunpack.c.l.bf16 %v340
        %v343 = vld [vmem:[%s321] sm:$0xff]
        %v344 = vld [vmem:[%s321 + $0x8] sm:$0xff]
        %v345 = vld [vmem:[%s321 + $0x10] sm:$0xff]
        %v346 = vld [vmem:[%s321 + $0x18] sm:$0xff]
        %v347 = vld [vmem:[%s321 + $0x20] sm:$0xff]
        %v348 = vld [vmem:[%s321 + $0x28] sm:$0xff]
        %v349 = vld [vmem:[%s321 + $0x30] sm:$0xff]
        %v350 = vld [vmem:[%s321 + $0x38] sm:$0xff]
        %v351 = vld [vmem:[%s321 + $0x40] sm:$0xff]
        %v352 = vld [vmem:[%s321 + $0x48] sm:$0xff]
        %v353 = vld [vmem:[%s321 + $0x50] sm:$0xff]
        %v354 = vld [vmem:[%s321 + $0x58] sm:$0xff]
        %v355 = vld [vmem:[%s321 + $0x60] sm:$0xff]
        %v356 = vld [vmem:[%s321 + $0x68] sm:$0xff]
        %v357 = vld [vmem:[%s321 + $0x70] sm:$0xff]
        %v358 = vld [vmem:[%s321 + $0x78] sm:$0xff]
        %v359 = vld [vmem:[%s326] sm:$0xf]
        %v360 = vld [vmem:[%s326 + $0x4] sm:$0xf]
        %v361 = vld [vmem:[%s331] sm:$0xf]
        %v362 = vld [vmem:[%s331 + $0x4] sm:$0xf]
        %v363 = vld [vmem:[%s331 + $0x8] sm:$0xf]
        %v364 = vld [vmem:[%s331 + $0xc] sm:$0xf]
        %v365 = vld [vmem:[%s331 + $0x10] sm:$0xf]
        %v366 = vld [vmem:[%s331 + $0x14] sm:$0xf]
        %v367 = vld [vmem:[%s331 + $0x18] sm:$0xf]
        %v368 = vld [vmem:[%s331 + $0x1c] sm:$0xf]
        %v369 = vld [vmem:[%s331 + $0x20] sm:$0xf]
        %v370 = vld [vmem:[%s331 + $0x24] sm:$0xf]
        %v371 = vld [vmem:[%s331 + $0x28] sm:$0xf]
        %v372 = vld [vmem:[%s331 + $0x2c] sm:$0xf]
        %v373 = vld [vmem:[%s331 + $0x30] sm:$0xf]
        %v374 = vld [vmem:[%s331 + $0x34] sm:$0xf]
        %v375 = vld [vmem:[%s331 + $0x38] sm:$0xf]
        %v376 = vld [vmem:[%s331 + $0x3c] sm:$0xf]
        %v377 = vld [vmem:[%s334] sm:$0x1]
        %v378 = vld [vmem:[%s337] sm:$0x1]
        %vm379 = vcmask 39936
        %v380 = vsel %vm379, %v341, -inf
        %381 = vmax.xlane.f32.xlu0 %v380
        %v382 = vpop.xlane.xlu0 %381
        %v383 = vsel %vm379, %v342, -inf
        %384 = vmax.xlane.f32.xlu0 %v383
        %v385 = vpop.xlane.xlu0 %384
        %v386 = vsub.f32 %v341, %v382
        %v387 = vsub.f32 %v342, %v385
        %v388 = vmul.f32 %v386, 1.442695
        %v389 = vpow.pop %v388
        %v390 = vmul.f32 %v387, 1.442695
        %v391 = vpow.pop %v390
        %v392 = vsel %vm379, %v389, 0.0
        %393 = vadd.xlane.f32.xlu0 %v392
        %v394 = vpop.xlane.xlu0 %393
        %v395 = vsel %vm379, %v391, 0.0
        %396 = vadd.xlane.f32.xlu0 %v395
        %v397 = vpop.xlane.xlu0 %396
        %v398 = vrcp.pop %v394
        %v399 = vrcp.pop %v397
        %v400 = vmul.f32 %v389, %v398
        %v401 = vmul.f32 %v391, %v399
        %v403 = vsel %vm379, %v400, 0
        %v406 = vsel %vm379, %v401, 0
        %v409 = vsel %vm379, %v343, 0
        %v412 = vsel %vm379, %v344, 0
        %v415 = vsel %vm379, %v345, 0
        %v418 = vsel %vm379, %v346, 0
        %v421 = vsel %vm379, %v347, 0
        %v424 = vsel %vm379, %v348, 0
        %v427 = vsel %vm379, %v349, 0
        %v430 = vsel %vm379, %v350, 0
        %v433 = vsel %vm379, %v351, 0
        %v436 = vsel %vm379, %v352, 0
        %v439 = vsel %vm379, %v353, 0
        %v442 = vsel %vm379, %v354, 0
        %v445 = vsel %vm379, %v355, 0
        %v448 = vsel %vm379, %v356, 0
        %v451 = vsel %vm379, %v357, 0
        %v454 = vsel %vm379, %v358, 0
        %456 = vmatprep.subr.mxu0 0.0
        %457 = vmatpush1.xpose.msra.mxu0 %v454
        %458 = vmatprep.subr.mxu0 0.0
        %459 = vmatpush1.xpose.msra.mxu0 %v451
        %460 = vmatprep.subr.mxu0 0.0
        %461 = vmatpush1.xpose.msra.mxu0 %v448
        %462 = vmatprep.subr.mxu0 0.0
        %463 = vmatpush1.xpose.msra.mxu0 %v445
        %464 = vmatprep.subr.mxu0 0.0
        %465 = vmatpush1.xpose.msra.mxu0 %v442
        %466 = vmatprep.subr.mxu0 0.0
        %467 = vmatpush1.xpose.msra.mxu0 %v439
        %468 = vmatprep.subr.mxu0 0.0
        %469 = vmatpush1.xpose.msra.mxu0 %v436
        %470 = vmatprep.subr.mxu0 0.0
        %471 = vmatpush1.xpose.msra.mxu0 %v433
        %472 = vmatprep.subr.mxu0 0.0
        %473 = vmatpush1.xpose.msra.mxu0 %v430
        %474 = vmatprep.subr.mxu0 0.0
        %475 = vmatpush1.xpose.msra.mxu0 %v427
        %476 = vmatprep.subr.mxu0 0.0
        %477 = vmatpush1.xpose.msra.mxu0 %v424
        %478 = vmatprep.subr.mxu0 0.0
        %479 = vmatpush1.xpose.msra.mxu0 %v421
        %480 = vmatprep.subr.mxu0 0.0
        %481 = vmatpush1.xpose.msra.mxu0 %v418
        %482 = vmatprep.subr.mxu0 0.0
        %483 = vmatpush1.xpose.msra.mxu0 %v415
        %484 = vmatprep.subr.mxu0 0.0
        %485 = vmatpush1.xpose.msra.mxu0 %v412
        %486 = vmatprep.subr.mxu0 0.0
        %487 = vmatpush1.xpose.msra.mxu0 %v409
        %488 = vmatprep.subr.mxu0 0.0
        %489 = vmatpush2.xpose.msra.mxu0 0.0
        %490 = vmatprep.subr.mxu0 0.0
        %491 = vmatpush2.xpose.msra.mxu0 0.0
        %492 = vmatprep.subr.mxu0 0.0
        %493 = vmatpush2.xpose.msra.mxu0 0.0
        %494 = vmatprep.subr.mxu0 0.0
        %495 = vmatpush2.xpose.msra.mxu0 0.0
        %496 = vmatprep.subr.mxu0 0.0
        %497 = vmatpush2.xpose.msra.mxu0 0.0
        %498 = vmatprep.subr.mxu0 0.0
        %499 = vmatpush2.xpose.msra.mxu0 0.0
        %500 = vmatprep.subr.mxu0 0.0
        %501 = vmatpush2.xpose.msra.mxu0 0.0
        %502 = vmatprep.subr.mxu0 0.0
        %503 = vmatpush2.xpose.msra.mxu0 0.0
        %504 = vmatprep.subr.mxu0 0.0
        %505 = vmatpush2.xpose.msra.mxu0 0.0
        %506 = vmatprep.subr.mxu0 0.0
        %507 = vmatpush2.xpose.msra.mxu0 0.0
        %508 = vmatprep.subr.mxu0 0.0
        %509 = vmatpush2.xpose.msra.mxu0 0.0
        %510 = vmatprep.subr.mxu0 0.0
        %511 = vmatpush2.xpose.msra.mxu0 0.0
        %512 = vmatprep.subr.mxu0 0.0
        %513 = vmatpush2.xpose.msra.mxu0 0.0
        %514 = vmatprep.subr.mxu0 0.0
        %515 = vmatpush2.xpose.msra.mxu0 0.0
        %516 = vmatprep.subr.mxu0 0.0
        %517 = vmatpush2.xpose.msra.mxu0 0.0
        %518 = vmatprep.subr.mxu0 0.0
        %519 = vmatpush2.xpose.msra.mxu0 0.0
        %520 = vmatprep.mubr.f32.mxu0 0.0
        %521 = vmatmul.mubr.f32.gmra.mxu0 %v403
        %v522 = vpop.f32.mrf.mxu0
        %v523 = vadd.f32 0.0, %v522
        %v524 = vpop.f32.mrf.mxu0
        %525 = vmatprep.mubr.f32.mxu0 0.0
        %526 = vmatmul.mubr.f32.gmra.mxu0 %v406
        %v527 = vpop.f32.mrf.mxu0
        %v528 = vadd.f32 0.0, %v527
        %v529 = vpop.f32.mrf.mxu0
        %530 = vdwg.mxu0
        %v531 = vsub.f32 0.0, %v523
        %v532 = vsub.f32 0.0, %v528
        %v533 = vunpack.c.l.bf16 %v359
        %v534 = vunpack.c.l.bf16 %v360
        %v535 = vmax.f32 %v533, 0.0
        %v536 = vmax.f32 %v534, 0.0
        %v537 = vand.u32 2147483647, %v533
        %v538 = vand.u32 2147483647, %v534
        %v539 = vsub.f32 0.0, %v537
        %v540 = vsub.f32 0.0, %v538
        %v541 = vmul.f32 %v539, 1.442695
        %v542 = vpow.pop %v541
        %v543 = vmul.f32 %v540, 1.442695
        %v544 = vpow.pop %v543
        %v545 = vadd.f32 %v542, 1.0
        %v546 = vlog2.pop %v545
        %v547 = vmul.f32 %v546, 0.6931472
        %v548 = vmul.f32 -0.5, %v542
        %v549 = vadd.f32 %v548, 1.0
        %v550 = vmul.f32 %v549, %v542
        %v551 = vand.u32 2147483647, %v542
        %vm552 = vcmp.lt.f32.partialorder %v551, 0.0004427343
        %v553 = vsel %vm552, %v550, %v547
        %v554 = vadd.f32 %v544, 1.0
        %v555 = vlog2.pop %v554
        %v556 = vmul.f32 %v555, 0.6931472
        %v557 = vmul.f32 -0.5, %v544
        %v558 = vadd.f32 %v557, 1.0
        %v559 = vmul.f32 %v558, %v544
        %v560 = vand.u32 2147483647, %v544
        %vm561 = vcmp.lt.f32.partialorder %v560, 0.0004427343
        %v562 = vsel %vm561, %v559, %v556
        %v563 = vadd.f32 %v535, %v553
        %v564 = vadd.f32 %v536, %v562
        %565 = vadd.xlane.f32.xlu0 %v563
        %v566 = vpop.xlane.xlu0 %565
        %567 = vadd.xlane.f32.xlu0 %v564
        %v568 = vpop.xlane.xlu0 %567
        %v569 = vsub.f32 0.0, %v533
        %v570 = vsub.f32 0.0, %v534
        %v571 = vmul.f32 %v569, 1.442695
        %v572 = vpow.pop %v571
        %v573 = vmul.f32 %v570, 1.442695
        %v574 = vpow.pop %v573
        %v575 = vadd.f32 %v572, 1.0
        %v576 = vadd.f32 %v574, 1.0
        %v577 = vrcp.pop %v575
        %v578 = vrcp.pop %v576
        %579 = vadd.xlane.f32.xlu0 %v577
        %v580 = vpop.xlane.xlu0 %579
        %581 = vadd.xlane.f32.xlu0 %v578
        %v582 = vpop.xlane.xlu0 %581
        %v583 = vsub.bf16 0, %v359
        %v584 = vsub.bf16 0, %v360
        %v585 = vpack.c.bf16 %v578, %v577
        %v588 = vunpack.c.l.b16 %v583
        %v589 = vunpack.c.l.b16 %v584
        %v590 = vpack.c.b16 %v589, %v588
        %v608 = vunpack.c.l.b16 %v361
        %v609 = vunpack.c.l.b16 %v362
        %v610 = vunpack.c.l.b16 %v363
        %v611 = vunpack.c.l.b16 %v364
        %v612 = vunpack.c.l.b16 %v365
        %v613 = vunpack.c.l.b16 %v366
        %v614 = vunpack.c.l.b16 %v367
        %v615 = vunpack.c.l.b16 %v368
        %v616 = vunpack.c.l.b16 %v369
        %v617 = vunpack.c.l.b16 %v370
        %v618 = vunpack.c.l.b16 %v371
        %v619 = vunpack.c.l.b16 %v372
        %v620 = vunpack.c.l.b16 %v373
        %v621 = vunpack.c.l.b16 %v374
        %v622 = vunpack.c.l.b16 %v375
        %v623 = vunpack.c.l.b16 %v376
        %v624 = vpack.c.b16 %v609, %v608
        %v625 = vpack.c.b16 %v611, %v610
        %v626 = vpack.c.b16 %v613, %v612
        %v627 = vpack.c.b16 %v615, %v614
        %v628 = vpack.c.b16 %v617, %v616
        %v629 = vpack.c.b16 %v619, %v618
        %v630 = vpack.c.b16 %v621, %v620
        %v631 = vpack.c.b16 %v623, %v622
        %640 = vmatprep.subr.bf16.mxu0 0
        %641 = vmatpush1.bf16.xpose.msra.mxu0 %v631
        %642 = vmatprep.subr.bf16.mxu0 0
        %643 = vmatpush1.bf16.xpose.msra.mxu0 %v630
        %644 = vmatprep.subr.bf16.mxu0 0
        %645 = vmatpush1.bf16.xpose.msra.mxu0 %v629
        %646 = vmatprep.subr.bf16.mxu0 0
        %647 = vmatpush1.bf16.xpose.msra.mxu0 %v628
        %648 = vmatprep.subr.bf16.mxu0 0
        %649 = vmatpush1.bf16.xpose.msra.mxu0 %v627
        %650 = vmatprep.subr.bf16.mxu0 0
        %651 = vmatpush1.bf16.xpose.msra.mxu0 %v626
        %652 = vmatprep.subr.bf16.mxu0 0
        %653 = vmatpush1.bf16.xpose.msra.mxu0 %v625
        %654 = vmatprep.subr.bf16.mxu0 0
        %655 = vmatpush1.bf16.xpose.msra.mxu0 %v624
        %656 = vmatprep.subr.bf16.mxu0 0
        %657 = vmatpush2.bf16.xpose.msra.mxu0 0
        %658 = vmatprep.subr.bf16.mxu0 0
        %659 = vmatpush2.bf16.xpose.msra.mxu0 0
        %660 = vmatprep.subr.bf16.mxu0 0
        %661 = vmatpush2.bf16.xpose.msra.mxu0 0
        %662 = vmatprep.subr.bf16.mxu0 0
        %663 = vmatpush2.bf16.xpose.msra.mxu0 0
        %664 = vmatprep.subr.bf16.mxu0 0
        %665 = vmatpush2.bf16.xpose.msra.mxu0 0
        %666 = vmatprep.subr.bf16.mxu0 0
        %667 = vmatpush2.bf16.xpose.msra.mxu0 0
        %668 = vmatprep.subr.bf16.mxu0 0
        %669 = vmatpush2.bf16.xpose.msra.mxu0 0
        %670 = vmatprep.subr.bf16.mxu0 0
        %671 = vmatpush2.bf16.xpose.msra.mxu0 0
        %672 = vmatprep.mubr.bf16.mxu0 0
        %673 = vmatmul.mubr.bf16.gmra.mxu0 %v590
        %v674 = vpop.f32.mrf.mxu0
        %v675 = vadd.f32 0.0, %v674
        %v676 = vpop.f32.mrf.mxu0
        %v677 = vpop.f32.mrf.mxu0
        %v678 = vadd.f32 0.0, %v677
        %v679 = vpop.f32.mrf.mxu0
        %680 = vmatprep.mubr.bf16.mxu0 0
        %681 = vmatmul.mubr.bf16.gmra.mxu0 %v585
        %v682 = vpop.f32.mrf.mxu0
        %v683 = vadd.f32 0.0, %v682
        %v684 = vpop.f32.mrf.mxu0
        %v685 = vpop.f32.mrf.mxu0
        %v686 = vadd.f32 0.0, %v685
        %v687 = vpop.f32.mrf.mxu0
        %688 = vdwg.mxu0
        %v689 = vadd.f32 %v675, %v566
        %v690 = vadd.f32 %v678, %v568
        %v691 = vmul.f32 %v689, 0.0078125
        %v692 = vmul.f32 %v690, 0.0078125
        %v693 = vmul.f32 %v683, 2.0
        %v694 = vmul.f32 %v686, 2.0
        %v695 = vadd.f32 %v693, 1.0
        %v696 = vadd.f32 %v694, 1.0
        %v698 = vlaneseq
        %v699 = vshrl.u32 %v698, 7
        %v700 = vsub.s32 0, %v699
        %v701 = vrot.slane %v377, %v700
        %v703 = vadd.f32 %v580, %v701
        %v704 = vadd.f32 %v582, %v701
        %v705 = vadd.f32 %v703, 1.0
        %v706 = vadd.f32 %v704, 1.0
        %v707 = vrcp.pop %v705
        %v708 = vrcp.pop %v706
        %v709 = vmul.f32 %v695, %v707
        %v710 = vmul.f32 %v696, %v708
        %v711 = vsub.f32 1.0, %v709
        %v712 = vsub.f32 1.0, %v710
        %v713 = vadd.f32 %v691, %v531
        %v714 = vadd.f32 %v692, %v532
        %v715 = vadd.f32 %v713, %v711
        %v716 = vadd.f32 %v714, %v712
        %vm717 = vcmp.gt.f32.partialorder %v378, 0.5
        %v718 = vsel %vm717, 1, 0
        %v719 = vlaneseq
        %v720 = vshrl.u32 %v719, 7
        %v721 = vsub.s32 0, %v720
        %v722 = vrot.slane %v718, %v721
        %vm723 = vcmp.eq.s32.totalorder %v722, 1
        %v724 = vsel %vm723, %v715, 1000000.0
        %v725 = vsel %vm723, %v716, 1000000.0
        %v726 = vlaneseq
        %v727 = vand.u32 %v726, 127
        %vm728 = vcmp.lt.s32.totalorder %v727, 4
        %v729 = vsel %vm728, %v400, -inf
        %v730 = vsel %vm728, %v401, -inf
        %v731 = vsel %vm379, %v729, -inf
        %732 = vmax.xlane.f32.xlu0 %v731
        %v733 = vpop.xlane.xlu0 %732
        %v734 = vsel %vm379, %v730, -inf
        %735 = vmax.xlane.f32.xlu0 %v734
        %v736 = vpop.xlane.xlu0 %735
        %vm737 = vcmp.eq.s32.totalorder %v727, 127
        %v738 = vsel %vm737, %v733, %v724
        %v739 = vsel %vm737, %v736, %v725
        %740 = vst [vmem:[%s311] sm:$0xff] %v738
        %741 = vst [vmem:[%s311 + $0x8] sm:$0xff] %v739
        %s742 = sand.u32 %s184, 1
        %s743 = scalar_lea.sflag [#allocation3], %s742
        %s744 = sand.u32 %s184, 1
        %s745 = smul.addr %s744, 16
        %s746 = scalar_lea.vmem [#allocation2], %s745
        // Predicated region
        $region45: #{tpu_custom_call.1} parent=43 // pred_check
          %p747 = pneg %p194
        $region46: #{tpu_custom_call.1} parent=43 // pred_check_branch
          %749 = sbr.rel (%p747) target = $region48
        $region47: #{tpu_custom_call.1} parent=43 // pred_region
          %s751 = ssub.s32 256, 256
          %752 = vsyncadd %s743, %s751
          %s753 = smul.addr %s20, 2
          %s754 = smul.addr %s753, 128
          %s755 = scalar_lea.hbm %s6, %s754
          %s756 = sshll.u32 %s746, 4
          %s757 = int_to_ptr.vmem [resolvable:$true] %s756
          %762 = dma.vmem_to_hbm [thread:$0]  %s757, 256, %s755, %s743, 128, 128, 8
        $region48: #{tpu_custom_call.1} parent=43 // pred_fallthru
          _
      $region44: #{tpu_custom_call.1} parent=5 // pred_fallthru
        _
      %p763 = scmp.le.s32.totalorder 2, %s15
      // Predicated region
      $region49: #{tpu_custom_call.1} parent=5 // pred_check
        %p764 = pneg %p763
      $region50: #{tpu_custom_call.1} parent=5 // pred_check_branch
        %766 = sbr.rel (%p764) target = $region52
      $region51: #{tpu_custom_call.1} parent=5 // pred_region
        %s767 = ssub.s32 %s15, 2
        // Predicated region
        $region53: #{tpu_custom_call.1} parent=51 // pred_check
          %p768 = pneg %p200
        $region54: #{tpu_custom_call.1} parent=51 // pred_check_branch
          %770 = sbr.rel (%p768) target = $region56
        $region55: #{tpu_custom_call.1} parent=51 // pred_region
          %s771 = sand.u32 %s185, 1
          %s772 = scalar_lea.sflag [#allocation3], %s771
          %s773 = sand.u32 %s185, 1
          %s774 = smul.addr %s773, 16
          %s775 = scalar_lea.vmem [#allocation2], %s774
          %776 = dma.done %s772, 256
        $region56: #{tpu_custom_call.1} parent=51 // pred_fallthru
          _
      $region52: #{tpu_custom_call.1} parent=5 // pred_fallthru
        _
    $region6: #{tpu_custom_call.1} parent=1 // loop_footer
      %s19 = sadd.s32 1, %s15
    $region7: #{tpu_custom_call.1} parent=1 // loop_footer_branch
      %14 = sbr.rel target = $region3
    $region8: #{tpu_custom_call.1} parent=1 // loop_exit
      _
    %777 = vsyncpa [#allocation3], 1
    %s778 = scalar_lea.sflag [#allocation3], 1
    %779 = vsyncpa %s778, 1

</llo_original>
